<compile_context>
chip_gen: v5e
topology: v5e:2x2
jax: 0.10.0
libtpu: 0.0.40
codegen_flags: <defaults>
</compile_context>

<pallas_src>
import math

import jax
import jax.numpy as jnp
import numpy as np
from jax import lax
from jax.experimental import pallas as pl
from jax.experimental.pallas import tpu as pltpu


def _round_up(x, m):
    return (x + m - 1) // m * m


def _balanced_tile(dim, cap, align):
    """Largest ~balanced tile <= ~cap, aligned to `align`."""
    cap = max(cap, align)
    if dim <= cap:
        return _round_up(dim, align)
    steps = pl.cdiv(dim, cap)
    return _round_up(pl.cdiv(dim, steps), align)


def _make_linear_kernel(nf, tk, mask_k_tail):
    def kernel(x_ref, w_ref, b_ref, o_ref, acc_ref):
        # x_ref: (tm, tk)  w_ref: (tk, tn)  b_ref: (1, tn)
        # o_ref: (tm, tn)  acc_ref: (tm, tn) f32 scratch
        k = pl.program_id(2)

        @pl.when(k == 0)
        def _init():
            acc_ref[...] = jnp.zeros_like(acc_ref)

        x = x_ref[...]
        if mask_k_tail:
            # Zero the out-of-range K columns of the (unpadded) activation tile.
            col = lax.broadcasted_iota(jnp.int32, x.shape, dimension=1)
            x = jnp.where(col + k * tk < nf, x, jnp.zeros_like(x))

        acc_ref[...] += jnp.dot(x, w_ref[...], preferred_element_type=jnp.float32)

        @pl.when(k == pl.num_programs(2) - 1)
        def _finish():
            o_ref[...] = (acc_ref[...] + b_ref[...]).astype(o_ref.dtype)

    return kernel


def flatten_linear_head(x, weight, bias):
    """y = dropout_p0(x) @ weight.T + bias over the last dim of x.

    x:      [..., nf]
    weight: [target_window, nf]   (PyTorch nn.Linear layout)
    bias:   [target_window]
    """
    nf = x.shape[-1]
    tw = weight.shape[0]
    lead = x.shape[:-1]
    M = int(math.prod(lead)) if lead else 1

    # head_dropout = 0 -> dropout is identity (eval semantics); nothing to do.

    # Small-problem fallback: pallas_call fixed cost dwarfs the math.
    if M < 8 or nf < 128 or (M * nf * tw) < (1 << 19):
        y = jnp.matmul(x, weight.T, precision=lax.Precision.HIGHEST) + bias
        return y

    itemsize = jnp.dtype(x.dtype).itemsize
    row_align = {4: 8, 2: 16, 1: 32}.get(itemsize, 8)  # packed sublane tiling

    # ---- tile sizes --------------------------------------------------------
    tn = _balanced_tile(tw, 256, 128)            # lane-dense output columns
    tk = _balanced_tile(nf, 1024, 128)           # large reduction tile
    tk = min(tk, max(128, (nf // 128) * 128))    # keep x's K block <= nf extent
    tm = _balanced_tile(M, 512, row_align)       # big M tile: less weight re-stream
    tm = min(tm, max(row_align, (M // row_align) * row_align))

    tw_pad = _round_up(tw, tn)
    grid_n = tw_pad // tn
    grid_k = pl.cdiv(nf, tk)
    nf_pad = grid_k * tk

    # v7x has 2 TensorCores: make sure some "parallel" axis has >= 2 tiles.
    if grid_n == 1 and M >= 2 * row_align and pl.cdiv(M, tm) < 2:
        tm = min(_round_up(pl.cdiv(M, 2), row_align), (M // row_align) * row_align)
    grid_m = pl.cdiv(M, tm)

    # ---- operands ----------------------------------------------------------
    x2 = x.reshape(M, nf)                        # no HBM copy of activations
    # Weight is a small static parameter: transpose + zero-pad once.
    # Zero K padding guarantees the masked/garbage x tail contributes exactly 0.
    w_t = weight.T
    if (nf_pad, tw_pad) != (nf, tw):
        w_t = jnp.pad(w_t, ((0, nf_pad - nf), (0, tw_pad - tw)))
    b2 = bias
    if tw_pad != tw:
        b2 = jnp.pad(b2, (0, tw_pad - tw))
    b2 = b2.reshape(1, tw_pad)

    mask_k_tail = (nf % tk) != 0

    cost = pl.CostEstimate(
        flops=2 * M * nf * tw,
        transcendentals=0,
        bytes_accessed=(
            M * nf * grid_n            # x re-streamed once per N tile
            + nf_pad * tw_pad * grid_m  # weight re-streamed once per M tile
            + M * tw_pad                # output
            + tw_pad * grid_m           # bias (tiny)
        ) * itemsize,
    )

    out = pl.pallas_call(
        _make_linear_kernel(nf, tk, mask_k_tail),
        out_shape=jax.ShapeDtypeStruct((M, tw_pad), x.dtype),
        grid_spec=pltpu.PrefetchScalarGridSpec(
            num_scalar_prefetch=0,
            grid=(grid_m, grid_n, grid_k),
            in_specs=[
                pl.BlockSpec((tm, tk), lambda i, j, k: (i, k)),   # x tile
                pl.BlockSpec((tk, tn), lambda i, j, k: (k, j)),   # weight (nf, tw) tile
                pl.BlockSpec((1, tn), lambda i, j, k: (0, j)),    # bias tile
            ],
            out_specs=pl.BlockSpec((tm, tn), lambda i, j, k: (i, j)),
            scratch_shapes=[pltpu.VMEM((tm, tn), jnp.float32)],
        ),
        compiler_params=pltpu.CompilerParams(
            dimension_semantics=("parallel", "parallel", "arbitrary"),
        ),
        cost_estimate=cost,
    )(x2, w_t, b2)

    if tw_pad != tw:
        out = out[:, :tw]
    return out.reshape(*lead, tw)


if __name__ == "__main__":
    key = jax.random.PRNGKey(0)
    k1, k2, k3, k4, k5, k6 = jax.random.split(key, 6)

    # --- Case 1: tiny shapes straight from the module (small-problem fallback)
    batch, n_vars, nf, target_window = 2, 4, 32, 16
    bound = 1.0 / math.sqrt(nf)
    x_s = jax.random.normal(k1, (batch, n_vars, nf), dtype=jnp.float32)
    w_s = jax.random.uniform(k2, (target_window, nf), jnp.float32, -bound, bound)
    b_s = jax.random.uniform(k3, (target_window,), jnp.float32, -bound, bound)

    y_s = flatten_linear_head(x_s, w_s, b_s)
    jax.block_until_ready(y_s)
    assert y_s.shape == (batch, n_vars, target_window)
    ref_s = (np.asarray(x_s, np.float64) @ np.asarray(w_s, np.float64).T
             + np.asarray(b_s, np.float64))
    np.testing.assert_allclose(np.asarray(y_s, np.float64), ref_s, atol=2e-3, rtol=2e-3)

    # --- Case 2: big enough to exercise the Pallas kernel (masked K tail,
    #     padded weight/bias, partial M tile, >=2 parallel M tiles).
    batch2, n_vars2, nf2, tw2 = 8, 17, 1200, 192   # M = 136
    bound2 = 1.0 / math.sqrt(nf2)
    x_l = jax.random.normal(k4, (batch2, n_vars2, nf2), dtype=jnp.float32)
    w_l = jax.random.uniform(k5, (tw2, nf2), jnp.float32, -bound2, bound2)
    b_l = jax.random.uniform(k6, (tw2,), jnp.float32, -bound2, bound2)

    y_l = flatten_linear_head(x_l, w_l, b_l)
    jax.block_until_ready(y_l)
    assert y_l.shape == (batch2, n_vars2, tw2)
    ref_l = (np.asarray(x_l, np.float64) @ np.asarray(w_l, np.float64).T
             + np.asarray(b_l, np.float64))
    np.testing.assert_allclose(np.asarray(y_l, np.float64), ref_l, atol=2e-3, rtol=2e-3)

    print("KERNEL_OK")
</pallas_src>

<mosaic_0001>
module attributes {stable_mosaic.version = 11 : i64} {
  func.func @kernel(%arg0: i32, %arg1: i32, %arg2: i32, %arg3: memref<72x640xf32, #tpu.memory_space<vmem>>, %arg4: memref<640x256xf32, #tpu.memory_space<vmem>>, %arg5: memref<1x256xf32, #tpu.memory_space<vmem>>, %arg6: memref<72x256xf32, #tpu.memory_space<vmem>>, %arg7: memref<72x256xf32, #tpu.memory_space<vmem>>) attributes {dimension_semantics = [#tpu.dimension_semantics<parallel>, #tpu.dimension_semantics<parallel>, #tpu.dimension_semantics<arbitrary>], iteration_bounds = array<i64: 2, 1, 2>, scalar_prefetch = 0 : i64, scratch_operands = 1 : i64, tpu.core_type = #tpu.core_type<tc>, window_params = [{transform_indices = @transform_0, window_bounds = array<i64: 72, 640>}, {transform_indices = @transform_1, window_bounds = array<i64: 640, 256>}, {transform_indices = @transform_2, window_bounds = array<i64: 1, 256>}, {transform_indices = @transform_3, window_bounds = array<i64: 72, 256>}]} {
    %c0_i32 = arith.constant 0 : i32
    %0 = arith.cmpi eq, %arg2, %c0_i32 : i32
    %1 = arith.extui %0 : i1 to i32
    %c0_i32_0 = arith.constant 0 : i32
    %2 = arith.cmpi ne, %1, %c0_i32_0 : i32
    scf.if %2 {
      %cst_10 = arith.constant 0.000000e+00 : f32
      %20 = vector.broadcast %cst_10 : f32 to vector<72x256xf32>
      %c0_11 = arith.constant 0 : index
      %c0_12 = arith.constant 0 : index
      %21 = vector.load %arg7[%c0_11, %c0_12] : memref<72x256xf32, #tpu.memory_space<vmem>>, vector<72x256xf32>
      tpu.vector_store %arg7[%c0_11, %c0_12], %20 {strides = array<i32>} : memref<72x256xf32, #tpu.memory_space<vmem>>, vector<72x256xf32>,
    } else {
    }
    %c0 = arith.constant 0 : index
    %c0_1 = arith.constant 0 : index
    %3 = vector.load %arg3[%c0, %c0_1] : memref<72x640xf32, #tpu.memory_space<vmem>>, vector<72x640xf32>
    %4 = tpu.iota {dimensions = array<i32: 1>} : vector<72x640xi32>
    %c640_i32 = arith.constant 640 : i32
    %5 = arith.muli %arg2, %c640_i32 : i32
    %6 = vector.broadcast %5 : i32 to vector<72x640xi32>
    %7 = arith.addi %4, %6 : vector<72x640xi32>
    %c1200_i32 = arith.constant 1200 : i32
    %8 = vector.broadcast %c1200_i32 : i32 to vector<72x640xi32>
    %9 = arith.cmpi slt, %7, %8 : vector<72x640xi32>
    %cst = arith.constant 0.000000e+00 : f32
    %10 = vector.broadcast %cst : f32 to vector<72x640xf32>
    %11 = arith.select %9, %3, %10 : vector<72x640xi1>, vector<72x640xf32>
    %c0_2 = arith.constant 0 : index
    %c0_3 = arith.constant 0 : index
    %12 = vector.load %arg7[%c0_2, %c0_3] : memref<72x256xf32, #tpu.memory_space<vmem>>, vector<72x256xf32>
    %c0_4 = arith.constant 0 : index
    %c0_5 = arith.constant 0 : index
    %13 = vector.load %arg4[%c0_4, %c0_5] : memref<640x256xf32, #tpu.memory_space<vmem>>, vector<640x256xf32>
    %cst_6 = arith.constant dense<0.000000e+00> : vector<72x256xf32>
    %14 = tpu.matmul %11, %13, %cst_6 {dimension_numbers = #tpu.dot_dimension_numbers<[1], [0], [0], [1], [0, 0, 1, 1], [], []>} : vector<72x640xf32>, vector<640x256xf32>, vector<72x256xf32> -> vector<72x256xf32>
    %15 = arith.addf %12, %14 : vector<72x256xf32>
    %c0_7 = arith.constant 0 : index
    %c0_8 = arith.constant 0 : index
    %16 = vector.load %arg7[%c0_7, %c0_8] : memref<72x256xf32, #tpu.memory_space<vmem>>, vector<72x256xf32>
    tpu.vector_store %arg7[%c0_7, %c0_8], %15 {strides = array<i32>} : memref<72x256xf32, #tpu.memory_space<vmem>>, vector<72x256xf32>,
    %c1_i32 = arith.constant 1 : i32
    %17 = arith.cmpi eq, %arg2, %c1_i32 : i32
    %18 = arith.extui %17 : i1 to i32
    %c0_i32_9 = arith.constant 0 : i32
    %19 = arith.cmpi ne, %18, %c0_i32_9 : i32
    scf.if %19 {
      %c0_10 = arith.constant 0 : index
      %c0_11 = arith.constant 0 : index
      %20 = vector.load %arg7[%c0_10, %c0_11] : memref<72x256xf32, #tpu.memory_space<vmem>>, vector<72x256xf32>
      %c0_12 = arith.constant 0 : index
      %c0_13 = arith.constant 0 : index
      %21 = vector.load %arg5[%c0_12, %c0_13] : memref<1x256xf32, #tpu.memory_space<vmem>>, vector<1x256xf32>
      %22 = vector.broadcast %21 : vector<1x256xf32> to vector<72x256xf32>
      %23 = arith.addf %20, %22 : vector<72x256xf32>
      %c0_14 = arith.constant 0 : index
      %c0_15 = arith.constant 0 : index
      %24 = vector.load %arg6[%c0_14, %c0_15] : memref<72x256xf32, #tpu.memory_space<vmem>>, vector<72x256xf32>
      tpu.vector_store %arg6[%c0_14, %c0_15], %23 {strides = array<i32>} : memref<72x256xf32, #tpu.memory_space<vmem>>, vector<72x256xf32>,
    } else {
    }
    return
  }
  func.func @transform_0(%arg0: i32, %arg1: i32, %arg2: i32) -> (i32, i32) {
    %c0_i32 = arith.constant 0 : i32
    return %arg0, %arg2 : i32, i32
  }
  func.func @transform_1(%arg0: i32, %arg1: i32, %arg2: i32) -> (i32, i32) {
    %c0_i32 = arith.constant 0 : i32
    return %arg2, %arg1 : i32, i32
  }
  func.func @transform_2(%arg0: i32, %arg1: i32, %arg2: i32) -> (i32, i32) {
    %c0_i32 = arith.constant 0 : i32
    %c0_i32_0 = arith.constant 0 : i32
    return %c0_i32, %arg1 : i32, i32
  }
  func.func @transform_3(%arg0: i32, %arg1: i32, %arg2: i32) -> (i32, i32) {
    %c0_i32 = arith.constant 0 : i32
    return %arg0, %arg1 : i32, i32
  }
}

</mosaic_0001>

<llo_original>
// kernel: tpu_custom_call.1
$region0: #{tpu_custom_call.1}
  #allocation0 [shape = 'u32[]', space=smem, size = 0x4, offset = 0x4, fixed_abs, tag = 'smem constant byte address 0x4 - core index']
  #allocation1 [shape = 'u32[72,128]{1,0:T(1,128)}', space=vmem, size = 0x9000, scoped, tag = 'internal scratch']
  #allocation2 [shape = 'f32[72,256]{1,0:T(8,128)}', space=vmem, size = 0x12000, scoped, tag = 'scratch operand']
  %s0 = inlined_call_operand.hbm [shape: f32[136,1200], index: 0, kind: input, shape index: {}]
  %s1 = inlined_call_operand.hbm [shape: f32[1280,256], index: 1, kind: input, shape index: {}]
  %s2 = inlined_call_operand.hbm [shape: f32[1,256], index: 2, kind: input, shape index: {}]
  %s3 = inlined_call_operand.hbm [shape: f32[136,256], index: 3, kind: output, shape index: {}]
  %s4 = sld [smem:[#allocation0]]
  $region65: #{tpu_custom_call.1} parent=0
    _
  %s6 = ssub.s32 1, %s4
  %s7 = scalar_select 0, %s6, %s4
  $region1: #{tpu_custom_call.1} parent=0
    #allocation3 [shape = 'u8[368640]{0}', space=vmem, size = 0x5a000, scoped, tag = 'input window, operand 0']
    #allocation4 [shape = 's32[2]{0}', space=sflag, size = 0x8, scoped, tag = 'scoped memory for tpu_custom_call.1']
    #allocation5 [shape = 's32[2]{0}', space=sflag, size = 0x8, scoped, tag = 'scoped memory for tpu_custom_call.1']
    #allocation6 [shape = 'u8[1310720]{0}', space=vmem, size = 0x140000, scoped, tag = 'input window, operand 1']
    #allocation7 [shape = 's32[2]{0}', space=sflag, size = 0x8, scoped, tag = 'scoped memory for tpu_custom_call.1']
    #allocation8 [shape = 'u8[1024]{0}', space=vmem, size = 0x400, scoped, tag = 'input window, operand 2, single buffered']
    #allocation9 [shape = 'u8[147456]{0}', space=vmem, size = 0x24000, scoped, tag = 'output window, operand 0']
    %8 = vsyncpa [#allocation4], 0
    %s9 = scalar_lea.sflag [#allocation4], 1
    %10 = vsyncpa %s9, 0
    %11 = vsyncpa [#allocation7], 0
    %s12 = scalar_lea.sflag [#allocation7], 1
    %13 = vsyncpa %s12, 0
    %14 = vsyncpa [#allocation5], 0
    %s15 = scalar_lea.sflag [#allocation5], 1
    %16 = vsyncpa %s15, 0
    loop: start=0, step=1, limit=6
    $region2: #{tpu_custom_call.1} parent=1 // loop_pre_header
      _
    $region3: #{tpu_custom_call.1} parent=1 // loop_header
      %s18 = sphi 0, %s22
      %p19 = scmp.ge.s32.totalorder %s18, 6
      %s25 = sphi 0, %s44
      %s26 = sphi 0, %s40
      %s27 = sphi 0, %s36
      %s28 = sphi 0, %s25
      %s29 = sphi 0, %s26
      %s30 = sphi 0, %s27
      %s31 = sphi 0, %s28
      %s32 = sphi 0, %s29
      %s33 = sphi 0, %s30
      %s49 = sphi 0, %s51
      %s52 = sphi 0, %s49
      %s53 = sphi 0, %s52
      %s69 = sphi 0, %s53
      %s77 = sphi 0, %s79
      %s80 = sphi 0, %s77
      %s81 = sphi 0, %s80
      %s97 = sphi 0, %s81
      %s103 = sphi 0, %s105
      %s106 = sphi 0, %s103
      %s107 = sphi 0, %s106
      %s123 = sphi 0, %s107
      %s131 = sphi 0, %s133
      %s134 = sphi 0, %s131
      %s135 = sphi 0, %s134
      %s151 = sphi 0, %s135
    $region4: #{tpu_custom_call.1} parent=1 // loop_header_branch
      %21 = sbr.rel (%p19) target = $region8
    $region5: #{tpu_custom_call.1} parent=1 // loop_body
      %s23 = ssub.s32 %s18, 1
      %s24 = ssub.s32 %s18, 2
      %s34 = sadd.s32 1, %s27
      %p35 = scmp.ge.s32.totalorder %s34, 2
      %s36 = scalar_select %p35, 0, %s34
      %s37 = sadd.s32 1, %s26
      %s38 = scalar_select %p35, %s37, %s26
      %p39 = scmp.ge.s32.totalorder %s38, 1
      %s40 = scalar_select %p39, 0, %s38
      %s41 = sadd.s32 1, %s25
      %s42 = scalar_select %p39, %s41, %s25
      %p43 = scmp.ge.s32.totalorder %s42, 2
      %s44 = scalar_select %p43, 0, %s42
      %s45 = ssub.s32 %s25, %s44
      %s46 = ssub.s32 %s27, %s36
      %s47 = sor.u32 %s45, %s46
      %p48 = scmp.eq.s32.totalorder %s47, 0
      %s50 = sadd.s32 %s49, 1
      %s51 = scalar_select %p48, %s49, %s50
      %p54 = pneg %p48
      %p55 = scmp.eq.s32.totalorder %s18, 3
      %p56 = por %p54, %p55
      %p57 = scmp.ne.s32.totalorder %s49, %s52
      %p58 = scmp.eq.s32.totalorder %s18, 0
      %p59 = por %p57, %p58
      %p60 = scmp.ne.s32.totalorder %s49, %s52
      %p61 = scmp.eq.s32.totalorder %s23, 3
      %p62 = por %p60, %p61
      %p63 = scmp.ne.s32.totalorder %s52, %s53
      %p64 = scmp.eq.s32.totalorder %s23, 0
      %p65 = por %p63, %p64
      %p66 = scmp.ne.s32.totalorder %s52, %s53
      %p67 = scmp.eq.s32.totalorder %s24, 3
      %p68 = por %p66, %p67
      %p70 = scmp.ne.s32.totalorder %s53, %s69
      %p71 = scmp.eq.s32.totalorder %s24, 0
      %p72 = por %p70, %p71
      %s73 = ssub.s32 %s27, %s36
      %s74 = ssub.s32 %s26, %s40
      %s75 = sor.u32 %s73, %s74
      %p76 = scmp.eq.s32.totalorder %s75, 0
      %s78 = sadd.s32 %s77, 1
      %s79 = scalar_select %p76, %s77, %s78
      %p82 = pneg %p76
      %p83 = scmp.eq.s32.totalorder %s18, 3
      %p84 = por %p82, %p83
      %p85 = scmp.ne.s32.totalorder %s77, %s80
      %p86 = scmp.eq.s32.totalorder %s18, 0
      %p87 = por %p85, %p86
      %p88 = scmp.ne.s32.totalorder %s77, %s80
      %p89 = scmp.eq.s32.totalorder %s23, 3
      %p90 = por %p88, %p89
      %p91 = scmp.ne.s32.totalorder %s80, %s81
      %p92 = scmp.eq.s32.totalorder %s23, 0
      %p93 = por %p91, %p92
      %p94 = scmp.ne.s32.totalorder %s80, %s81
      %p95 = scmp.eq.s32.totalorder %s24, 3
      %p96 = por %p94, %p95
      %p98 = scmp.ne.s32.totalorder %s81, %s97
      %p99 = scmp.eq.s32.totalorder %s24, 0
      %p100 = por %p98, %p99
      %s101 = ssub.s32 %s26, %s40
      %p102 = scmp.eq.s32.totalorder %s101, 0
      %s104 = sadd.s32 %s103, 1
      %s105 = scalar_select %p102, %s103, %s104
      %p108 = pneg %p102
      %p109 = scmp.eq.s32.totalorder %s18, 3
      %p110 = por %p108, %p109
      %p111 = scmp.ne.s32.totalorder %s103, %s106
      %p112 = scmp.eq.s32.totalorder %s18, 0
      %p113 = por %p111, %p112
      %p114 = scmp.ne.s32.totalorder %s103, %s106
      %p115 = scmp.eq.s32.totalorder %s23, 3
      %p116 = por %p114, %p115
      %p117 = scmp.ne.s32.totalorder %s106, %s107
      %p118 = scmp.eq.s32.totalorder %s23, 0
      %p119 = por %p117, %p118
      %p120 = scmp.ne.s32.totalorder %s106, %s107
      %p121 = scmp.eq.s32.totalorder %s24, 3
      %p122 = por %p120, %p121
      %p124 = scmp.ne.s32.totalorder %s107, %s123
      %p125 = scmp.eq.s32.totalorder %s24, 0
      %p126 = por %p124, %p125
      %s127 = ssub.s32 %s25, %s44
      %s128 = ssub.s32 %s26, %s40
      %s129 = sor.u32 %s127, %s128
      %p130 = scmp.eq.s32.totalorder %s129, 0
      %s132 = sadd.s32 %s131, 1
      %s133 = scalar_select %p130, %s131, %s132
      %p136 = pneg %p130
      %p137 = scmp.eq.s32.totalorder %s18, 3
      %p138 = por %p136, %p137
      %p139 = scmp.ne.s32.totalorder %s131, %s134
      %p140 = scmp.eq.s32.totalorder %s18, 0
      %p141 = por %p139, %p140
      %p142 = scmp.ne.s32.totalorder %s131, %s134
      %p143 = scmp.eq.s32.totalorder %s23, 3
      %p144 = por %p142, %p143
      %p145 = scmp.ne.s32.totalorder %s134, %s135
      %p146 = scmp.eq.s32.totalorder %s23, 0
      %p147 = por %p145, %p146
      %p148 = scmp.ne.s32.totalorder %s134, %s135
      %p149 = scmp.eq.s32.totalorder %s24, 3
      %p150 = por %p148, %p149
      %p152 = scmp.ne.s32.totalorder %s135, %s151
      %p153 = scmp.eq.s32.totalorder %s24, 0
      %p154 = por %p152, %p153
      %p155 = scmp.le.s32.totalorder 1, %s18
      %p156 = scmp.lt.s32.totalorder %s18, 5
      %p157 = pnand %p155, %p156
      %p158 = pneg %p157
      // Predicated region
      $region9: #{tpu_custom_call.1} parent=5 // pred_check
        _
      $region10: #{tpu_custom_call.1} parent=5 // pred_check_branch
        %160 = sbr.rel (%p157) target = $region12
      $region11: #{tpu_custom_call.1} parent=5 // pred_region
        %s161 = ssub.s32 %s18, 1
        // Predicated region
        $region13: #{tpu_custom_call.1} parent=11 // pred_check
          %p162 = pneg %p119
        $region14: #{tpu_custom_call.1} parent=11 // pred_check_branch
          %164 = sbr.rel (%p162) target = $region16
        $region15: #{tpu_custom_call.1} parent=11 // pred_region
          %s165 = smul.u32 2, %s29
          %167 = vsyncadd [#allocation7], 0
          %s168 = scalar_lea.hbm %s2, %s165
          %s170 = sshll.u32 %s168, 4
          %s171 = int_to_ptr.hbm [resolvable:$true] %s170
          %s172 = sshll.u32 [#allocation8], 4
          %s173 = int_to_ptr.vmem [resolvable:$true] %s172
          %175 = dma.hbm_to_vmem [thread:$0]  %s171, 32, %s173, [#allocation7]
        $region16: #{tpu_custom_call.1} parent=11 // pred_fallthru
          _
      $region12: #{tpu_custom_call.1} parent=5 // pred_fallthru
        _
      %p176 = scmp.lt.s32.totalorder %s18, 4
      // Predicated region
      $region17: #{tpu_custom_call.1} parent=5 // pred_check
        %p177 = pneg %p176
      $region18: #{tpu_custom_call.1} parent=5 // pred_check_branch
        %179 = sbr.rel (%p177) target = $region20
      $region19: #{tpu_custom_call.1} parent=5 // pred_region
        // Predicated region
        $region21: #{tpu_custom_call.1} parent=19 // pred_check
          %p180 = pneg %p59
        $region22: #{tpu_custom_call.1} parent=19 // pred_check_branch
          %182 = sbr.rel (%p180) target = $region24
        $region23: #{tpu_custom_call.1} parent=19 // pred_region
          %s183 = sand.u32 %s49, 1
          %s184 = scalar_lea.sflag [#allocation4], %s183
          %s185 = sand.u32 %s49, 1
          %s186 = smul.addr %s185, 360
          %s187 = scalar_lea.vmem [#allocation3], %s186
          %s188 = smul.u32 9, %s25
          %s189 = smul.u32 5, %s27
          %s190 = ssub.s32 17, %s188
          %p191 = scmp.lt.s32.totalorder %s190, 9
          %s192 = scalar_select %p191, %s190, 9
          %s193 = smul.u32 8, %s192
          %s194 = smul.u32 %s193, 5
          %s195 = ssub.s32 360, %s194
          %s196 = sshll.u32 %s195, 4
          %197 = vsyncadd %s184, %s196
          %p198 = scmp.ne.s32.totalorder 0, %s194
          %s199 = smul.addr %s188, 10
          %s200 = sadd.s32 %s189, %s199
          %s201 = smul.addr %s200, 8
          %s202 = scalar_lea.hbm %s0, %s201
          %s203 = smul.u32 40, %s192
          %s204 = sshll.u32 %s202, 4
          %s205 = int_to_ptr.hbm [resolvable:$true] %s204
          %s206 = sshll.u32 %s187, 4
          %s207 = int_to_ptr.vmem [resolvable:$true] %s206
          %s208 = sshll.u32 %s203, 4
          %212 = dma.hbm_to_vmem [thread:$0]  (%p198), %s205, %s208, %s207, %s184, 1280, 640, 40
        $region24: #{tpu_custom_call.1} parent=19 // pred_fallthru
          _
        // Predicated region
        $region25: #{tpu_custom_call.1} parent=19 // pred_check
          %p213 = pneg %p87
        $region26: #{tpu_custom_call.1} parent=19 // pred_check_branch
          %215 = sbr.rel (%p213) target = $region28
        $region27: #{tpu_custom_call.1} parent=19 // pred_region
          %s216 = sand.u32 %s18, 1
          %s217 = scalar_lea.sflag [#allocation7], %s216
          %s218 = sand.u32 %s77, 1
          %s219 = smul.addr %s218, 1280
          %s220 = scalar_lea.vmem [#allocation6], %s219
          %s221 = smul.u32 80, %s27
          %s222 = smul.u32 2, %s26
          %224 = vsyncadd %s217, 0
          %s225 = smul.addr %s221, 2
          %s226 = sadd.s32 %s222, %s225
          %s227 = smul.addr %s226, 8
          %s228 = scalar_lea.hbm %s1, %s227
          %s229 = sshll.u32 %s228, 4
          %s230 = int_to_ptr.hbm [resolvable:$true] %s229
          %s231 = sshll.u32 %s220, 4
          %s232 = int_to_ptr.vmem [resolvable:$true] %s231
          %237 = dma.hbm_to_vmem [thread:$0]  %s230, 20480, %s232, %s217, 256, 256, 16
        $region28: #{tpu_custom_call.1} parent=19 // pred_fallthru
          _
      $region20: #{tpu_custom_call.1} parent=5 // pred_fallthru
        _
      %p238 = scmp.le.s32.totalorder 1, %s18
      %p239 = scmp.lt.s32.totalorder %s18, 5
      %p240 = pnand %p238, %p239
      %p241 = pneg %p240
      // Predicated region
      $region29: #{tpu_custom_call.1} parent=5 // pred_check
        _
      $region30: #{tpu_custom_call.1} parent=5 // pred_check_branch
        %243 = sbr.rel (%p240) target = $region32
      $region31: #{tpu_custom_call.1} parent=5 // pred_region
        %s244 = ssub.s32 %s18, 1
        %s245 = sand.u32 %s52, 1
        %s246 = scalar_lea.sflag [#allocation4], %s245
        %s247 = sand.u32 %s52, 1
        %s248 = smul.addr %s247, 360
        %s249 = scalar_lea.vmem [#allocation3], %s248
        // Predicated region
        $region33: #{tpu_custom_call.1} parent=31 // pred_check
          %p250 = pneg %p65
        $region34: #{tpu_custom_call.1} parent=31 // pred_check_branch
          %252 = sbr.rel (%p250) target = $region36
        $region35: #{tpu_custom_call.1} parent=31 // pred_region
          %254 = dma.done %s246, 5760
        $region36: #{tpu_custom_call.1} parent=31 // pred_fallthru
          _
        %s255 = sand.u32 %s23, 1
        %s256 = scalar_lea.sflag [#allocation7], %s255
        %s257 = sand.u32 %s80, 1
        %s258 = smul.addr %s257, 1280
        %s259 = scalar_lea.vmem [#allocation6], %s258
        // Predicated region
        $region37: #{tpu_custom_call.1} parent=31 // pred_check
          %p260 = pneg %p93
        $region38: #{tpu_custom_call.1} parent=31 // pred_check_branch
          %262 = sbr.rel (%p260) target = $region40
        $region39: #{tpu_custom_call.1} parent=31 // pred_region
          %264 = dma.done %s256, 20480
        $region40: #{tpu_custom_call.1} parent=31 // pred_fallthru
          _
        // Predicated region
        $region41: #{tpu_custom_call.1} parent=31 // pred_check
          %p265 = pneg %p119
        $region42: #{tpu_custom_call.1} parent=31 // pred_check_branch
          %267 = sbr.rel (%p265) target = $region44
        $region43: #{tpu_custom_call.1} parent=31 // pred_region
          %269 = dma.done [#allocation7], 32
        $region44: #{tpu_custom_call.1} parent=31 // pred_fallthru
          _
        %s270 = sand.u32 %s52, 1
        %s271 = scalar_lea.sflag [#allocation4], %s270
        %s272 = sand.u32 %s52, 1
        %s273 = smul.addr %s272, 360
        %s274 = scalar_lea.vmem [#allocation3], %s273
        %p275 = pneg %p65
        %p276 = pneg %p62
        %s277 = sand.u32 %s23, 1
        %s278 = scalar_lea.sflag [#allocation7], %s277
        %s279 = sand.u32 %s80, 1
        %s280 = smul.addr %s279, 1280
        %s281 = scalar_lea.vmem [#allocation6], %s280
        %p282 = pneg %p93
        %p283 = pneg %p90
        %p284 = pneg %p119
        %p285 = pneg %p116
        %p286 = pneg %p147
        %p287 = pneg %p144
        %s288 = sand.u32 %s134, 1
        %s289 = scalar_lea.sflag [#allocation5], %s288
        %s290 = sand.u32 %s134, 1
        %s291 = smul.addr %s290, 144
        %s292 = scalar_lea.vmem [#allocation9], %s291
        %s293 = smul.u32 9, %s28
        %s294 = smul.u32 5, %s30
        %s295 = ssub.s32 17, %s293
        %p296 = scmp.lt.s32.totalorder %s295, 9
        %s297 = scalar_select %p296, %s295, 9
        %s298 = smul.u32 8, %s297
        %s299 = smul.u32 %s298, 5
        %s300 = smul.u32 80, %s30
        %s301 = smul.u32 2, %s29
        %s302 = smul.u32 2, %s29
        %s303 = smul.u32 9, %s28
        %s304 = smul.u32 2, %s29
        %s305 = ssub.s32 17, %s303
        %p306 = scmp.lt.s32.totalorder %s305, 9
        %s307 = scalar_select %p306, %s305, 9
        %s308 = smul.u32 8, %s307
        %s309 = smul.u32 %s308, 2
        %p310 = scmp.eq.s32.totalorder %s30, 0
        // Predicated region
        $region45: #{tpu_custom_call.1} parent=31 // pred_check
          %p311 = pneg %p310
        $region46: #{tpu_custom_call.1} parent=31 // pred_check_branch
          %313 = sbr.rel (%p311) target = $region48
        $region47: #{tpu_custom_call.1} parent=31 // pred_region
          %314 = vst [vmem:[#allocation2] sm:$0xff] 0.0
          %315 = vst [vmem:[#allocation2 + $0x8] sm:$0xff] 0.0
          %316 = vst [vmem:[#allocation2 + $0x10] sm:$0xff] 0.0
          %317 = vst [vmem:[#allocation2 + $0x18] sm:$0xff] 0.0
          %318 = vst [vmem:[#allocation2 + $0x20] sm:$0xff] 0.0
          %319 = vst [vmem:[#allocation2 + $0x28] sm:$0xff] 0.0
          %320 = vst [vmem:[#allocation2 + $0x30] sm:$0xff] 0.0
          %321 = vst [vmem:[#allocation2 + $0x38] sm:$0xff] 0.0
          %322 = vst [vmem:[#allocation2 + $0x40] sm:$0xff] 0.0
          %323 = vst [vmem:[#allocation2 + $0x48] sm:$0xff] 0.0
          %324 = vst [vmem:[#allocation2 + $0x50] sm:$0xff] 0.0
          %325 = vst [vmem:[#allocation2 + $0x58] sm:$0xff] 0.0
          %326 = vst [vmem:[#allocation2 + $0x60] sm:$0xff] 0.0
          %327 = vst [vmem:[#allocation2 + $0x68] sm:$0xff] 0.0
          %328 = vst [vmem:[#allocation2 + $0x70] sm:$0xff] 0.0
          %329 = vst [vmem:[#allocation2 + $0x78] sm:$0xff] 0.0
          %330 = vst [vmem:[#allocation2 + $0x80] sm:$0xff] 0.0
          %331 = vst [vmem:[#allocation2 + $0x88] sm:$0xff] 0.0
        $region48: #{tpu_custom_call.1} parent=31 // pred_fallthru
          _
        %v332 = vld [vmem:[%s249] sm:$0xff]
        %v333 = vld [vmem:[%s249 + $0x8] sm:$0xff]
        %v334 = vld [vmem:[%s249 + $0x10] sm:$0xff]
        %v335 = vld [vmem:[%s249 + $0x18] sm:$0xff]
        %v336 = vld [vmem:[%s249 + $0x20] sm:$0xff]
        %v337 = vld [vmem:[%s249 + $0x28] sm:$0xff]
        %v338 = vld [vmem:[%s249 + $0x30] sm:$0xff]
        %v339 = vld [vmem:[%s249 + $0x38] sm:$0xff]
        %v340 = vld [vmem:[%s249 + $0x40] sm:$0xff]
        %v341 = vld [vmem:[%s249 + $0x48] sm:$0xff]
        %v342 = vld [vmem:[%s249 + $0x50] sm:$0xff]
        %v343 = vld [vmem:[%s249 + $0x58] sm:$0xff]
        %v344 = vld [vmem:[%s249 + $0x60] sm:$0xff]
        %v345 = vld [vmem:[%s249 + $0x68] sm:$0xff]
        %v346 = vld [vmem:[%s249 + $0x70] sm:$0xff]
        %v347 = vld [vmem:[%s249 + $0x78] sm:$0xff]
        %v348 = vld [vmem:[%s249 + $0x80] sm:$0xff]
        %v349 = vld [vmem:[%s249 + $0x88] sm:$0xff]
        %v350 = vld [vmem:[%s249 + $0x90] sm:$0xff]
        %v351 = vld [vmem:[%s249 + $0x98] sm:$0xff]
        %v352 = vld [vmem:[%s249 + $0xa0] sm:$0xff]
        %v353 = vld [vmem:[%s249 + $0xa8] sm:$0xff]
        %v354 = vld [vmem:[%s249 + $0xb0] sm:$0xff]
        %v355 = vld [vmem:[%s249 + $0xb8] sm:$0xff]
        %v356 = vld [vmem:[%s249 + $0xc0] sm:$0xff]
        %v357 = vld [vmem:[%s249 + $0xc8] sm:$0xff]
        %v358 = vld [vmem:[%s249 + $0xd0] sm:$0xff]
        %v359 = vld [vmem:[%s249 + $0xd8] sm:$0xff]
        %v360 = vld [vmem:[%s249 + $0xe0] sm:$0xff]
        %v361 = vld [vmem:[%s249 + $0xe8] sm:$0xff]
        %v362 = vld [vmem:[%s249 + $0xf0] sm:$0xff]
        %v363 = vld [vmem:[%s249 + $0xf8] sm:$0xff]
        %v364 = vld [vmem:[%s249 + $0x100] sm:$0xff]
        %v365 = vld [vmem:[%s249 + $0x108] sm:$0xff]
        %v366 = vld [vmem:[%s249 + $0x110] sm:$0xff]
        %v367 = vld [vmem:[%s249 + $0x118] sm:$0xff]
        %v368 = vld [vmem:[%s249 + $0x120] sm:$0xff]
        %v369 = vld [vmem:[%s249 + $0x128] sm:$0xff]
        %v370 = vld [vmem:[%s249 + $0x130] sm:$0xff]
        %v371 = vld [vmem:[%s249 + $0x138] sm:$0xff]
        %v372 = vld [vmem:[%s249 + $0x140] sm:$0xff]
        %v373 = vld [vmem:[%s249 + $0x148] sm:$0xff]
        %v374 = vld [vmem:[%s249 + $0x150] sm:$0xff]
        %v375 = vld [vmem:[%s249 + $0x158] sm:$0xff]
        %v376 = vld [vmem:[%s249 + $0x160] sm:$0xff]
        %v377 = vlaneseq
        %v378 = vand.u32 %v377, 127
        %v379 = vadd.s32 %v378, 128
        %v380 = vadd.s32 %v378, 256
        %v381 = vadd.s32 %v378, 384
        %v382 = vadd.s32 %v378, 512
        %s383 = smul.u32 %s30, 640
        %v384 = vstv %s383
        %v385 = vadd.s32 %v378, %v384
        %v386 = vadd.s32 %v379, %v384
        %v387 = vadd.s32 %v380, %v384
        %v388 = vadd.s32 %v381, %v384
        %v389 = vadd.s32 %v382, %v384
        %vm390 = vcmp.lt.s32.totalorder %v385, 1200
        %vm391 = vcmp.lt.s32.totalorder %v386, 1200
        %vm392 = vcmp.lt.s32.totalorder %v387, 1200
        %vm393 = vcmp.lt.s32.totalorder %v388, 1200
        %vm394 = vcmp.lt.s32.totalorder %v389, 1200
        %v395 = vsel %vm390, %v332, 0.0
        %v396 = vsel %vm391, %v333, 0.0
        %v397 = vsel %vm392, %v334, 0.0
        %v398 = vsel %vm393, %v335, 0.0
        %v399 = vsel %vm394, %v336, 0.0
        %v400 = vsel %vm390, %v337, 0.0
        %v401 = vsel %vm391, %v338, 0.0
        %v402 = vsel %vm392, %v339, 0.0
        %v403 = vsel %vm393, %v340, 0.0
        %v404 = vsel %vm394, %v341, 0.0
        %v405 = vsel %vm390, %v342, 0.0
        %v406 = vsel %vm391, %v343, 0.0
        %v407 = vsel %vm392, %v344, 0.0
        %v408 = vsel %vm393, %v345, 0.0
        %v409 = vsel %vm394, %v346, 0.0
        %v410 = vsel %vm390, %v347, 0.0
        %v411 = vsel %vm391, %v348, 0.0
        %v412 = vsel %vm392, %v349, 0.0
        %v413 = vsel %vm393, %v350, 0.0
        %v414 = vsel %vm394, %v351, 0.0
        %v415 = vsel %vm390, %v352, 0.0
        %v416 = vsel %vm391, %v353, 0.0
        %v417 = vsel %vm392, %v354, 0.0
        %v418 = vsel %vm393, %v355, 0.0
        %v419 = vsel %vm394, %v356, 0.0
        %v420 = vsel %vm390, %v357, 0.0
        %v421 = vsel %vm391, %v358, 0.0
        %v422 = vsel %vm392, %v359, 0.0
        %v423 = vsel %vm393, %v360, 0.0
        %v424 = vsel %vm394, %v361, 0.0
        %v425 = vsel %vm390, %v362, 0.0
        %v426 = vsel %vm391, %v363, 0.0
        %v427 = vsel %vm392, %v364, 0.0
        %v428 = vsel %vm393, %v365, 0.0
        %v429 = vsel %vm394, %v366, 0.0
        %v430 = vsel %vm390, %v367, 0.0
        %v431 = vsel %vm391, %v368, 0.0
        %v432 = vsel %vm392, %v369, 0.0
        %v433 = vsel %vm393, %v370, 0.0
        %v434 = vsel %vm394, %v371, 0.0
        %v435 = vsel %vm390, %v372, 0.0
        %v436 = vsel %vm391, %v373, 0.0
        %v437 = vsel %vm392, %v374, 0.0
        %v438 = vsel %vm393, %v375, 0.0
        %v439 = vsel %vm394, %v376, 0.0
        %v440 = vld [vmem:[#allocation2] sm:$0xff]
        %v441 = vld [vmem:[#allocation2 + $0x8] sm:$0xff]
        %v442 = vld [vmem:[#allocation2 + $0x10] sm:$0xff]
        %v443 = vld [vmem:[#allocation2 + $0x18] sm:$0xff]
        %v444 = vld [vmem:[#allocation2 + $0x20] sm:$0xff]
        %v445 = vld [vmem:[#allocation2 + $0x28] sm:$0xff]
        %v446 = vld [vmem:[#allocation2 + $0x30] sm:$0xff]
        %v447 = vld [vmem:[#allocation2 + $0x38] sm:$0xff]
        %v448 = vld [vmem:[#allocation2 + $0x40] sm:$0xff]
        %v449 = vld [vmem:[#allocation2 + $0x48] sm:$0xff]
        %v450 = vld [vmem:[#allocation2 + $0x50] sm:$0xff]
        %v451 = vld [vmem:[#allocation2 + $0x58] sm:$0xff]
        %v452 = vld [vmem:[#allocation2 + $0x60] sm:$0xff]
        %v453 = vld [vmem:[#allocation2 + $0x68] sm:$0xff]
        %v454 = vld [vmem:[#allocation2 + $0x70] sm:$0xff]
        %v455 = vld [vmem:[#allocation2 + $0x78] sm:$0xff]
        %v456 = vld [vmem:[#allocation2 + $0x80] sm:$0xff]
        %v457 = vld [vmem:[#allocation2 + $0x88] sm:$0xff]
        %v458 = vld [vmem:[%s259] sm:$0xff]
        %v459 = vld [vmem:[%s259 + $0x8] sm:$0xff]
        %v460 = vld [vmem:[%s259 + $0x10] sm:$0xff]
        %v461 = vld [vmem:[%s259 + $0x18] sm:$0xff]
        %v462 = vld [vmem:[%s259 + $0x20] sm:$0xff]
        %v463 = vld [vmem:[%s259 + $0x28] sm:$0xff]
        %v464 = vld [vmem:[%s259 + $0x30] sm:$0xff]
        %v465 = vld [vmem:[%s259 + $0x38] sm:$0xff]
        %v466 = vld [vmem:[%s259 + $0x40] sm:$0xff]
        %v467 = vld [vmem:[%s259 + $0x48] sm:$0xff]
        %v468 = vld [vmem:[%s259 + $0x50] sm:$0xff]
        %v469 = vld [vmem:[%s259 + $0x58] sm:$0xff]
        %v470 = vld [vmem:[%s259 + $0x60] sm:$0xff]
        %v471 = vld [vmem:[%s259 + $0x68] sm:$0xff]
        %v472 = vld [vmem:[%s259 + $0x70] sm:$0xff]
        %v473 = vld [vmem:[%s259 + $0x78] sm:$0xff]
        %v474 = vld [vmem:[%s259 + $0x80] sm:$0xff]
        %v475 = vld [vmem:[%s259 + $0x88] sm:$0xff]
        %v476 = vld [vmem:[%s259 + $0x90] sm:$0xff]
        %v477 = vld [vmem:[%s259 + $0x98] sm:$0xff]
        %v478 = vld [vmem:[%s259 + $0xa0] sm:$0xff]
        %v479 = vld [vmem:[%s259 + $0xa8] sm:$0xff]
        %v480 = vld [vmem:[%s259 + $0xb0] sm:$0xff]
        %v481 = vld [vmem:[%s259 + $0xb8] sm:$0xff]
        %v482 = vld [vmem:[%s259 + $0xc0] sm:$0xff]
        %v483 = vld [vmem:[%s259 + $0xc8] sm:$0xff]
        %v484 = vld [vmem:[%s259 + $0xd0] sm:$0xff]
        %v485 = vld [vmem:[%s259 + $0xd8] sm:$0xff]
        %v486 = vld [vmem:[%s259 + $0xe0] sm:$0xff]
        %v487 = vld [vmem:[%s259 + $0xe8] sm:$0xff]
        %v488 = vld [vmem:[%s259 + $0xf0] sm:$0xff]
        %v489 = vld [vmem:[%s259 + $0xf8] sm:$0xff]
        %v490 = vld [vmem:[%s259 + $0x100] sm:$0xff]
        %v491 = vld [vmem:[%s259 + $0x108] sm:$0xff]
        %v492 = vld [vmem:[%s259 + $0x110] sm:$0xff]
        %v493 = vld [vmem:[%s259 + $0x118] sm:$0xff]
        %v494 = vld [vmem:[%s259 + $0x120] sm:$0xff]
        %v495 = vld [vmem:[%s259 + $0x128] sm:$0xff]
        %v496 = vld [vmem:[%s259 + $0x130] sm:$0xff]
        %v497 = vld [vmem:[%s259 + $0x138] sm:$0xff]
        %v498 = vld [vmem:[%s259 + $0x140] sm:$0xff]
        %v499 = vld [vmem:[%s259 + $0x148] sm:$0xff]
        %v500 = vld [vmem:[%s259 + $0x150] sm:$0xff]
        %v501 = vld [vmem:[%s259 + $0x158] sm:$0xff]
        %v502 = vld [vmem:[%s259 + $0x160] sm:$0xff]
        %v503 = vld [vmem:[%s259 + $0x168] sm:$0xff]
        %v504 = vld [vmem:[%s259 + $0x170] sm:$0xff]
        %v505 = vld [vmem:[%s259 + $0x178] sm:$0xff]
        %v506 = vld [vmem:[%s259 + $0x180] sm:$0xff]
        %v507 = vld [vmem:[%s259 + $0x188] sm:$0xff]
        %v508 = vld [vmem:[%s259 + $0x190] sm:$0xff]
        %v509 = vld [vmem:[%s259 + $0x198] sm:$0xff]
        %v510 = vld [vmem:[%s259 + $0x1a0] sm:$0xff]
        %v511 = vld [vmem:[%s259 + $0x1a8] sm:$0xff]
        %v512 = vld [vmem:[%s259 + $0x1b0] sm:$0xff]
        %v513 = vld [vmem:[%s259 + $0x1b8] sm:$0xff]
        %v514 = vld [vmem:[%s259 + $0x1c0] sm:$0xff]
        %v515 = vld [vmem:[%s259 + $0x1c8] sm:$0xff]
        %v516 = vld [vmem:[%s259 + $0x1d0] sm:$0xff]
        %v517 = vld [vmem:[%s259 + $0x1d8] sm:$0xff]
        %v518 = vld [vmem:[%s259 + $0x1e0] sm:$0xff]
        %v519 = vld [vmem:[%s259 + $0x1e8] sm:$0xff]
        %v520 = vld [vmem:[%s259 + $0x1f0] sm:$0xff]
        %v521 = vld [vmem:[%s259 + $0x1f8] sm:$0xff]
        %v522 = vld [vmem:[%s259 + $0x200] sm:$0xff]
        %v523 = vld [vmem:[%s259 + $0x208] sm:$0xff]
        %v524 = vld [vmem:[%s259 + $0x210] sm:$0xff]
        %v525 = vld [vmem:[%s259 + $0x218] sm:$0xff]
        %v526 = vld [vmem:[%s259 + $0x220] sm:$0xff]
        %v527 = vld [vmem:[%s259 + $0x228] sm:$0xff]
        %v528 = vld [vmem:[%s259 + $0x230] sm:$0xff]
        %v529 = vld [vmem:[%s259 + $0x238] sm:$0xff]
        %v530 = vld [vmem:[%s259 + $0x240] sm:$0xff]
        %v531 = vld [vmem:[%s259 + $0x248] sm:$0xff]
        %v532 = vld [vmem:[%s259 + $0x250] sm:$0xff]
        %v533 = vld [vmem:[%s259 + $0x258] sm:$0xff]
        %v534 = vld [vmem:[%s259 + $0x260] sm:$0xff]
        %v535 = vld [vmem:[%s259 + $0x268] sm:$0xff]
        %v536 = vld [vmem:[%s259 + $0x270] sm:$0xff]
        %v537 = vld [vmem:[%s259 + $0x278] sm:$0xff]
        %v538 = vld [vmem:[%s259 + $0x280] sm:$0xff]
        %v539 = vld [vmem:[%s259 + $0x288] sm:$0xff]
        %v540 = vld [vmem:[%s259 + $0x290] sm:$0xff]
        %v541 = vld [vmem:[%s259 + $0x298] sm:$0xff]
        %v542 = vld [vmem:[%s259 + $0x2a0] sm:$0xff]
        %v543 = vld [vmem:[%s259 + $0x2a8] sm:$0xff]
        %v544 = vld [vmem:[%s259 + $0x2b0] sm:$0xff]
        %v545 = vld [vmem:[%s259 + $0x2b8] sm:$0xff]
        %v546 = vld [vmem:[%s259 + $0x2c0] sm:$0xff]
        %v547 = vld [vmem:[%s259 + $0x2c8] sm:$0xff]
        %v548 = vld [vmem:[%s259 + $0x2d0] sm:$0xff]
        %v549 = vld [vmem:[%s259 + $0x2d8] sm:$0xff]
        %v550 = vld [vmem:[%s259 + $0x2e0] sm:$0xff]
        %v551 = vld [vmem:[%s259 + $0x2e8] sm:$0xff]
        %v552 = vld [vmem:[%s259 + $0x2f0] sm:$0xff]
        %v553 = vld [vmem:[%s259 + $0x2f8] sm:$0xff]
        %v554 = vld [vmem:[%s259 + $0x300] sm:$0xff]
        %v555 = vld [vmem:[%s259 + $0x308] sm:$0xff]
        %v556 = vld [vmem:[%s259 + $0x310] sm:$0xff]
        %v557 = vld [vmem:[%s259 + $0x318] sm:$0xff]
        %v558 = vld [vmem:[%s259 + $0x320] sm:$0xff]
        %v559 = vld [vmem:[%s259 + $0x328] sm:$0xff]
        %v560 = vld [vmem:[%s259 + $0x330] sm:$0xff]
        %v561 = vld [vmem:[%s259 + $0x338] sm:$0xff]
        %v562 = vld [vmem:[%s259 + $0x340] sm:$0xff]
        %v563 = vld [vmem:[%s259 + $0x348] sm:$0xff]
        %v564 = vld [vmem:[%s259 + $0x350] sm:$0xff]
        %v565 = vld [vmem:[%s259 + $0x358] sm:$0xff]
        %v566 = vld [vmem:[%s259 + $0x360] sm:$0xff]
        %v567 = vld [vmem:[%s259 + $0x368] sm:$0xff]
        %v568 = vld [vmem:[%s259 + $0x370] sm:$0xff]
        %v569 = vld [vmem:[%s259 + $0x378] sm:$0xff]
        %v570 = vld [vmem:[%s259 + $0x380] sm:$0xff]
        %v571 = vld [vmem:[%s259 + $0x388] sm:$0xff]
        %v572 = vld [vmem:[%s259 + $0x390] sm:$0xff]
        %v573 = vld [vmem:[%s259 + $0x398] sm:$0xff]
        %v574 = vld [vmem:[%s259 + $0x3a0] sm:$0xff]
        %v575 = vld [vmem:[%s259 + $0x3a8] sm:$0xff]
        %v576 = vld [vmem:[%s259 + $0x3b0] sm:$0xff]
        %v577 = vld [vmem:[%s259 + $0x3b8] sm:$0xff]
        %v578 = vld [vmem:[%s259 + $0x3c0] sm:$0xff]
        %v579 = vld [vmem:[%s259 + $0x3c8] sm:$0xff]
        %v580 = vld [vmem:[%s259 + $0x3d0] sm:$0xff]
        %v581 = vld [vmem:[%s259 + $0x3d8] sm:$0xff]
        %v582 = vld [vmem:[%s259 + $0x3e0] sm:$0xff]
        %v583 = vld [vmem:[%s259 + $0x3e8] sm:$0xff]
        %v584 = vld [vmem:[%s259 + $0x3f0] sm:$0xff]
        %v585 = vld [vmem:[%s259 + $0x3f8] sm:$0xff]
        %v586 = vld [vmem:[%s259 + $0x400] sm:$0xff]
        %v587 = vld [vmem:[%s259 + $0x408] sm:$0xff]
        %v588 = vld [vmem:[%s259 + $0x410] sm:$0xff]
        %v589 = vld [vmem:[%s259 + $0x418] sm:$0xff]
        %v590 = vld [vmem:[%s259 + $0x420] sm:$0xff]
        %v591 = vld [vmem:[%s259 + $0x428] sm:$0xff]
        %v592 = vld [vmem:[%s259 + $0x430] sm:$0xff]
        %v593 = vld [vmem:[%s259 + $0x438] sm:$0xff]
        %v594 = vld [vmem:[%s259 + $0x440] sm:$0xff]
        %v595 = vld [vmem:[%s259 + $0x448] sm:$0xff]
        %v596 = vld [vmem:[%s259 + $0x450] sm:$0xff]
        %v597 = vld [vmem:[%s259 + $0x458] sm:$0xff]
        %v598 = vld [vmem:[%s259 + $0x460] sm:$0xff]
        %v599 = vld [vmem:[%s259 + $0x468] sm:$0xff]
        %v600 = vld [vmem:[%s259 + $0x470] sm:$0xff]
        %v601 = vld [vmem:[%s259 + $0x478] sm:$0xff]
        %v602 = vld [vmem:[%s259 + $0x480] sm:$0xff]
        %v603 = vld [vmem:[%s259 + $0x488] sm:$0xff]
        %v604 = vld [vmem:[%s259 + $0x490] sm:$0xff]
        %v605 = vld [vmem:[%s259 + $0x498] sm:$0xff]
        %v606 = vld [vmem:[%s259 + $0x4a0] sm:$0xff]
        %v607 = vld [vmem:[%s259 + $0x4a8] sm:$0xff]
        %v608 = vld [vmem:[%s259 + $0x4b0] sm:$0xff]
        %v609 = vld [vmem:[%s259 + $0x4b8] sm:$0xff]
        %v610 = vld [vmem:[%s259 + $0x4c0] sm:$0xff]
        %v611 = vld [vmem:[%s259 + $0x4c8] sm:$0xff]
        %v612 = vld [vmem:[%s259 + $0x4d0] sm:$0xff]
        %v613 = vld [vmem:[%s259 + $0x4d8] sm:$0xff]
        %v614 = vld [vmem:[%s259 + $0x4e0] sm:$0xff]
        %v615 = vld [vmem:[%s259 + $0x4e8] sm:$0xff]
        %v616 = vld [vmem:[%s259 + $0x4f0] sm:$0xff]
        %v617 = vld [vmem:[%s259 + $0x4f8] sm:$0xff]
        %618 = vmatpush.msra.mxu0 %v488
        %619 = vmatpush.msra.mxu0 %v486
        %620 = vmatpush.msra.mxu0 %v484
        %621 = vmatpush.msra.mxu0 %v482
        %622 = vmatpush.msra.mxu0 %v480
        %623 = vmatpush.msra.mxu0 %v478
        %624 = vmatpush.msra.mxu0 %v476
        %625 = vmatpush.msra.mxu0 %v474
        %626 = vmatpush.msra.mxu0 %v472
        %627 = vmatpush.msra.mxu0 %v470
        %628 = vmatpush.msra.mxu0 %v468
        %629 = vmatpush.msra.mxu0 %v466
        %630 = vmatpush.msra.mxu0 %v464
        %631 = vmatpush.msra.mxu0 %v462
        %632 = vmatpush.msra.mxu0 %v460
        %633 = vmatpush.msra.mxu0 %v458
        %634 = vmatmul.f32.gmra.mxu0 %v395
        %v635 = vpop.f32.mrf.mxu0
        %v636 = vadd.f32 0.0, %v635
        %637 = vmatmul.f32.gmra.mxu0 %v400
        %v638 = vpop.f32.mrf.mxu0
        %v639 = vadd.f32 0.0, %v638
        %640 = vmatmul.f32.gmra.mxu0 %v405
        %v641 = vpop.f32.mrf.mxu0
        %v642 = vadd.f32 0.0, %v641
        %643 = vmatmul.f32.gmra.mxu0 %v410
        %v644 = vpop.f32.mrf.mxu0
        %v645 = vadd.f32 0.0, %v644
        %646 = vmatmul.f32.gmra.mxu0 %v415
        %v647 = vpop.f32.mrf.mxu0
        %v648 = vadd.f32 0.0, %v647
        %649 = vmatmul.f32.gmra.mxu0 %v420
        %v650 = vpop.f32.mrf.mxu0
        %v651 = vadd.f32 0.0, %v650
        %652 = vmatmul.f32.gmra.mxu0 %v425
        %v653 = vpop.f32.mrf.mxu0
        %v654 = vadd.f32 0.0, %v653
        %655 = vmatmul.f32.gmra.mxu0 %v430
        %v656 = vpop.f32.mrf.mxu0
        %v657 = vadd.f32 0.0, %v656
        %658 = vmatmul.f32.gmra.mxu0 %v435
        %v659 = vpop.f32.mrf.mxu0
        %v660 = vadd.f32 0.0, %v659
        %661 = vdwg.mxu0
        %662 = vmatpush.msra.mxu0 %v520
        %663 = vmatpush.msra.mxu0 %v518
        %664 = vmatpush.msra.mxu0 %v516
        %665 = vmatpush.msra.mxu0 %v514
        %666 = vmatpush.msra.mxu0 %v512
        %667 = vmatpush.msra.mxu0 %v510
        %668 = vmatpush.msra.mxu0 %v508
        %669 = vmatpush.msra.mxu0 %v506
        %670 = vmatpush.msra.mxu0 %v504
        %671 = vmatpush.msra.mxu0 %v502
        %672 = vmatpush.msra.mxu0 %v500
        %673 = vmatpush.msra.mxu0 %v498
        %674 = vmatpush.msra.mxu0 %v496
        %675 = vmatpush.msra.mxu0 %v494
        %676 = vmatpush.msra.mxu0 %v492
        %677 = vmatpush.msra.mxu0 %v490
        %678 = vmatmul.f32.gmra.mxu0 %v396
        %v679 = vpop.f32.mrf.mxu0
        %v680 = vadd.f32 %v636, %v679
        %681 = vmatmul.f32.gmra.mxu0 %v401
        %v682 = vpop.f32.mrf.mxu0
        %v683 = vadd.f32 %v639, %v682
        %684 = vmatmul.f32.gmra.mxu0 %v406
        %v685 = vpop.f32.mrf.mxu0
        %v686 = vadd.f32 %v642, %v685
        %687 = vmatmul.f32.gmra.mxu0 %v411
        %v688 = vpop.f32.mrf.mxu0
        %v689 = vadd.f32 %v645, %v688
        %690 = vmatmul.f32.gmra.mxu0 %v416
        %v691 = vpop.f32.mrf.mxu0
        %v692 = vadd.f32 %v648, %v691
        %693 = vmatmul.f32.gmra.mxu0 %v421
        %v694 = vpop.f32.mrf.mxu0
        %v695 = vadd.f32 %v651, %v694
        %696 = vmatmul.f32.gmra.mxu0 %v426
        %v697 = vpop.f32.mrf.mxu0
        %v698 = vadd.f32 %v654, %v697
        %699 = vmatmul.f32.gmra.mxu0 %v431
        %v700 = vpop.f32.mrf.mxu0
        %v701 = vadd.f32 %v657, %v700
        %702 = vmatmul.f32.gmra.mxu0 %v436
        %v703 = vpop.f32.mrf.mxu0
        %v704 = vadd.f32 %v660, %v703
        %705 = vdwg.mxu0
        %706 = vmatpush.msra.mxu0 %v552
        %707 = vmatpush.msra.mxu0 %v550
        %708 = vmatpush.msra.mxu0 %v548
        %709 = vmatpush.msra.mxu0 %v546
        %710 = vmatpush.msra.mxu0 %v544
        %711 = vmatpush.msra.mxu0 %v542
        %712 = vmatpush.msra.mxu0 %v540
        %713 = vmatpush.msra.mxu0 %v538
        %714 = vmatpush.msra.mxu0 %v536
        %715 = vmatpush.msra.mxu0 %v534
        %716 = vmatpush.msra.mxu0 %v532
        %717 = vmatpush.msra.mxu0 %v530
        %718 = vmatpush.msra.mxu0 %v528
        %719 = vmatpush.msra.mxu0 %v526
        %720 = vmatpush.msra.mxu0 %v524
        %721 = vmatpush.msra.mxu0 %v522
        %722 = vmatmul.f32.gmra.mxu0 %v397
        %v723 = vpop.f32.mrf.mxu0
        %v724 = vadd.f32 %v680, %v723
        %725 = vmatmul.f32.gmra.mxu0 %v402
        %v726 = vpop.f32.mrf.mxu0
        %v727 = vadd.f32 %v683, %v726
        %728 = vmatmul.f32.gmra.mxu0 %v407
        %v729 = vpop.f32.mrf.mxu0
        %v730 = vadd.f32 %v686, %v729
        %731 = vmatmul.f32.gmra.mxu0 %v412
        %v732 = vpop.f32.mrf.mxu0
        %v733 = vadd.f32 %v689, %v732
        %734 = vmatmul.f32.gmra.mxu0 %v417
        %v735 = vpop.f32.mrf.mxu0
        %v736 = vadd.f32 %v692, %v735
        %737 = vmatmul.f32.gmra.mxu0 %v422
        %v738 = vpop.f32.mrf.mxu0
        %v739 = vadd.f32 %v695, %v738
        %740 = vmatmul.f32.gmra.mxu0 %v427
        %v741 = vpop.f32.mrf.mxu0
        %v742 = vadd.f32 %v698, %v741
        %743 = vmatmul.f32.gmra.mxu0 %v432
        %v744 = vpop.f32.mrf.mxu0
        %v745 = vadd.f32 %v701, %v744
        %746 = vmatmul.f32.gmra.mxu0 %v437
        %v747 = vpop.f32.mrf.mxu0
        %v748 = vadd.f32 %v704, %v747
        %749 = vdwg.mxu0
        %750 = vmatpush.msra.mxu0 %v584
        %751 = vmatpush.msra.mxu0 %v582
        %752 = vmatpush.msra.mxu0 %v580
        %753 = vmatpush.msra.mxu0 %v578
        %754 = vmatpush.msra.mxu0 %v576
        %755 = vmatpush.msra.mxu0 %v574
        %756 = vmatpush.msra.mxu0 %v572
        %757 = vmatpush.msra.mxu0 %v570
        %758 = vmatpush.msra.mxu0 %v568
        %759 = vmatpush.msra.mxu0 %v566
        %760 = vmatpush.msra.mxu0 %v564
        %761 = vmatpush.msra.mxu0 %v562
        %762 = vmatpush.msra.mxu0 %v560
        %763 = vmatpush.msra.mxu0 %v558
        %764 = vmatpush.msra.mxu0 %v556
        %765 = vmatpush.msra.mxu0 %v554
        %766 = vmatmul.f32.gmra.mxu0 %v398
        %v767 = vpop.f32.mrf.mxu0
        %v768 = vadd.f32 %v724, %v767
        %769 = vmatmul.f32.gmra.mxu0 %v403
        %v770 = vpop.f32.mrf.mxu0
        %v771 = vadd.f32 %v727, %v770
        %772 = vmatmul.f32.gmra.mxu0 %v408
        %v773 = vpop.f32.mrf.mxu0
        %v774 = vadd.f32 %v730, %v773
        %775 = vmatmul.f32.gmra.mxu0 %v413
        %v776 = vpop.f32.mrf.mxu0
        %v777 = vadd.f32 %v733, %v776
        %778 = vmatmul.f32.gmra.mxu0 %v418
        %v779 = vpop.f32.mrf.mxu0
        %v780 = vadd.f32 %v736, %v779
        %781 = vmatmul.f32.gmra.mxu0 %v423
        %v782 = vpop.f32.mrf.mxu0
        %v783 = vadd.f32 %v739, %v782
        %784 = vmatmul.f32.gmra.mxu0 %v428
        %v785 = vpop.f32.mrf.mxu0
        %v786 = vadd.f32 %v742, %v785
        %787 = vmatmul.f32.gmra.mxu0 %v433
        %v788 = vpop.f32.mrf.mxu0
        %v789 = vadd.f32 %v745, %v788
        %790 = vmatmul.f32.gmra.mxu0 %v438
        %v791 = vpop.f32.mrf.mxu0
        %v792 = vadd.f32 %v748, %v791
        %793 = vdwg.mxu0
        %794 = vmatpush.msra.mxu0 %v616
        %795 = vmatpush.msra.mxu0 %v614
        %796 = vmatpush.msra.mxu0 %v612
        %797 = vmatpush.msra.mxu0 %v610
        %798 = vmatpush.msra.mxu0 %v608
        %799 = vmatpush.msra.mxu0 %v606
        %800 = vmatpush.msra.mxu0 %v604
        %801 = vmatpush.msra.mxu0 %v602
        %802 = vmatpush.msra.mxu0 %v600
        %803 = vmatpush.msra.mxu0 %v598
        %804 = vmatpush.msra.mxu0 %v596
        %805 = vmatpush.msra.mxu0 %v594
        %806 = vmatpush.msra.mxu0 %v592
        %807 = vmatpush.msra.mxu0 %v590
        %808 = vmatpush.msra.mxu0 %v588
        %809 = vmatpush.msra.mxu0 %v586
        %810 = vmatmul.f32.gmra.mxu0 %v399
        %v811 = vpop.f32.mrf.mxu0
        %v812 = vadd.f32 %v768, %v811
        %813 = vmatmul.f32.gmra.mxu0 %v404
        %v814 = vpop.f32.mrf.mxu0
        %v815 = vadd.f32 %v771, %v814
        %816 = vmatmul.f32.gmra.mxu0 %v409
        %v817 = vpop.f32.mrf.mxu0
        %v818 = vadd.f32 %v774, %v817
        %819 = vmatmul.f32.gmra.mxu0 %v414
        %v820 = vpop.f32.mrf.mxu0
        %v821 = vadd.f32 %v777, %v820
        %822 = vmatmul.f32.gmra.mxu0 %v419
        %v823 = vpop.f32.mrf.mxu0
        %v824 = vadd.f32 %v780, %v823
        %825 = vmatmul.f32.gmra.mxu0 %v424
        %v826 = vpop.f32.mrf.mxu0
        %v827 = vadd.f32 %v783, %v826
        %828 = vmatmul.f32.gmra.mxu0 %v429
        %v829 = vpop.f32.mrf.mxu0
        %v830 = vadd.f32 %v786, %v829
        %831 = vmatmul.f32.gmra.mxu0 %v434
        %v832 = vpop.f32.mrf.mxu0
        %v833 = vadd.f32 %v789, %v832
        %834 = vmatmul.f32.gmra.mxu0 %v439
        %v835 = vpop.f32.mrf.mxu0
        %v836 = vadd.f32 %v792, %v835
        %837 = vdwg.mxu0
        %838 = vmatpush.msra.mxu0 %v489
        %839 = vmatpush.msra.mxu0 %v487
        %840 = vmatpush.msra.mxu0 %v485
        %841 = vmatpush.msra.mxu0 %v483
        %842 = vmatpush.msra.mxu0 %v481
        %843 = vmatpush.msra.mxu0 %v479
        %844 = vmatpush.msra.mxu0 %v477
        %845 = vmatpush.msra.mxu0 %v475
        %846 = vmatpush.msra.mxu0 %v473
        %847 = vmatpush.msra.mxu0 %v471
        %848 = vmatpush.msra.mxu0 %v469
        %849 = vmatpush.msra.mxu0 %v467
        %850 = vmatpush.msra.mxu0 %v465
        %851 = vmatpush.msra.mxu0 %v463
        %852 = vmatpush.msra.mxu0 %v461
        %853 = vmatpush.msra.mxu0 %v459
        %854 = vmatmul.f32.gmra.mxu0 %v395
        %v855 = vpop.f32.mrf.mxu0
        %v856 = vadd.f32 0.0, %v855
        %857 = vmatmul.f32.gmra.mxu0 %v400
        %v858 = vpop.f32.mrf.mxu0
        %v859 = vadd.f32 0.0, %v858
        %860 = vmatmul.f32.gmra.mxu0 %v405
        %v861 = vpop.f32.mrf.mxu0
        %v862 = vadd.f32 0.0, %v861
        %863 = vmatmul.f32.gmra.mxu0 %v410
        %v864 = vpop.f32.mrf.mxu0
        %v865 = vadd.f32 0.0, %v864
        %866 = vmatmul.f32.gmra.mxu0 %v415
        %v867 = vpop.f32.mrf.mxu0
        %v868 = vadd.f32 0.0, %v867
        %869 = vmatmul.f32.gmra.mxu0 %v420
        %v870 = vpop.f32.mrf.mxu0
        %v871 = vadd.f32 0.0, %v870
        %872 = vmatmul.f32.gmra.mxu0 %v425
        %v873 = vpop.f32.mrf.mxu0
        %v874 = vadd.f32 0.0, %v873
        %875 = vmatmul.f32.gmra.mxu0 %v430
        %v876 = vpop.f32.mrf.mxu0
        %v877 = vadd.f32 0.0, %v876
        %878 = vmatmul.f32.gmra.mxu0 %v435
        %v879 = vpop.f32.mrf.mxu0
        %v880 = vadd.f32 0.0, %v879
        %881 = vdwg.mxu0
        %882 = vmatpush.msra.mxu0 %v521
        %883 = vmatpush.msra.mxu0 %v519
        %884 = vmatpush.msra.mxu0 %v517
        %885 = vmatpush.msra.mxu0 %v515
        %886 = vmatpush.msra.mxu0 %v513
        %887 = vmatpush.msra.mxu0 %v511
        %888 = vmatpush.msra.mxu0 %v509
        %889 = vmatpush.msra.mxu0 %v507
        %890 = vmatpush.msra.mxu0 %v505
        %891 = vmatpush.msra.mxu0 %v503
        %892 = vmatpush.msra.mxu0 %v501
        %893 = vmatpush.msra.mxu0 %v499
        %894 = vmatpush.msra.mxu0 %v497
        %895 = vmatpush.msra.mxu0 %v495
        %896 = vmatpush.msra.mxu0 %v493
        %897 = vmatpush.msra.mxu0 %v491
        %898 = vmatmul.f32.gmra.mxu0 %v396
        %v899 = vpop.f32.mrf.mxu0
        %v900 = vadd.f32 %v856, %v899
        %901 = vmatmul.f32.gmra.mxu0 %v401
        %v902 = vpop.f32.mrf.mxu0
        %v903 = vadd.f32 %v859, %v902
        %904 = vmatmul.f32.gmra.mxu0 %v406
        %v905 = vpop.f32.mrf.mxu0
        %v906 = vadd.f32 %v862, %v905
        %907 = vmatmul.f32.gmra.mxu0 %v411
        %v908 = vpop.f32.mrf.mxu0
        %v909 = vadd.f32 %v865, %v908
        %910 = vmatmul.f32.gmra.mxu0 %v416
        %v911 = vpop.f32.mrf.mxu0
        %v912 = vadd.f32 %v868, %v911
        %913 = vmatmul.f32.gmra.mxu0 %v421
        %v914 = vpop.f32.mrf.mxu0
        %v915 = vadd.f32 %v871, %v914
        %916 = vmatmul.f32.gmra.mxu0 %v426
        %v917 = vpop.f32.mrf.mxu0
        %v918 = vadd.f32 %v874, %v917
        %919 = vmatmul.f32.gmra.mxu0 %v431
        %v920 = vpop.f32.mrf.mxu0
        %v921 = vadd.f32 %v877, %v920
        %922 = vmatmul.f32.gmra.mxu0 %v436
        %v923 = vpop.f32.mrf.mxu0
        %v924 = vadd.f32 %v880, %v923
        %925 = vdwg.mxu0
        %926 = vmatpush.msra.mxu0 %v553
        %927 = vmatpush.msra.mxu0 %v551
        %928 = vmatpush.msra.mxu0 %v549
        %929 = vmatpush.msra.mxu0 %v547
        %930 = vmatpush.msra.mxu0 %v545
        %931 = vmatpush.msra.mxu0 %v543
        %932 = vmatpush.msra.mxu0 %v541
        %933 = vmatpush.msra.mxu0 %v539
        %934 = vmatpush.msra.mxu0 %v537
        %935 = vmatpush.msra.mxu0 %v535
        %936 = vmatpush.msra.mxu0 %v533
        %937 = vmatpush.msra.mxu0 %v531
        %938 = vmatpush.msra.mxu0 %v529
        %939 = vmatpush.msra.mxu0 %v527
        %940 = vmatpush.msra.mxu0 %v525
        %941 = vmatpush.msra.mxu0 %v523
        %942 = vmatmul.f32.gmra.mxu0 %v397
        %v943 = vpop.f32.mrf.mxu0
        %v944 = vadd.f32 %v900, %v943
        %945 = vmatmul.f32.gmra.mxu0 %v402
        %v946 = vpop.f32.mrf.mxu0
        %v947 = vadd.f32 %v903, %v946
        %948 = vmatmul.f32.gmra.mxu0 %v407
        %v949 = vpop.f32.mrf.mxu0
        %v950 = vadd.f32 %v906, %v949
        %951 = vmatmul.f32.gmra.mxu0 %v412
        %v952 = vpop.f32.mrf.mxu0
        %v953 = vadd.f32 %v909, %v952
        %954 = vmatmul.f32.gmra.mxu0 %v417
        %v955 = vpop.f32.mrf.mxu0
        %v956 = vadd.f32 %v912, %v955
        %957 = vmatmul.f32.gmra.mxu0 %v422
        %v958 = vpop.f32.mrf.mxu0
        %v959 = vadd.f32 %v915, %v958
        %960 = vmatmul.f32.gmra.mxu0 %v427
        %v961 = vpop.f32.mrf.mxu0
        %v962 = vadd.f32 %v918, %v961
        %963 = vmatmul.f32.gmra.mxu0 %v432
        %v964 = vpop.f32.mrf.mxu0
        %v965 = vadd.f32 %v921, %v964
        %966 = vmatmul.f32.gmra.mxu0 %v437
        %v967 = vpop.f32.mrf.mxu0
        %v968 = vadd.f32 %v924, %v967
        %969 = vdwg.mxu0
        %970 = vmatpush.msra.mxu0 %v585
        %971 = vmatpush.msra.mxu0 %v583
        %972 = vmatpush.msra.mxu0 %v581
        %973 = vmatpush.msra.mxu0 %v579
        %974 = vmatpush.msra.mxu0 %v577
        %975 = vmatpush.msra.mxu0 %v575
        %976 = vmatpush.msra.mxu0 %v573
        %977 = vmatpush.msra.mxu0 %v571
        %978 = vmatpush.msra.mxu0 %v569
        %979 = vmatpush.msra.mxu0 %v567
        %980 = vmatpush.msra.mxu0 %v565
        %981 = vmatpush.msra.mxu0 %v563
        %982 = vmatpush.msra.mxu0 %v561
        %983 = vmatpush.msra.mxu0 %v559
        %984 = vmatpush.msra.mxu0 %v557
        %985 = vmatpush.msra.mxu0 %v555
        %986 = vmatmul.f32.gmra.mxu0 %v398
        %v987 = vpop.f32.mrf.mxu0
        %v988 = vadd.f32 %v944, %v987
        %989 = vmatmul.f32.gmra.mxu0 %v403
        %v990 = vpop.f32.mrf.mxu0
        %v991 = vadd.f32 %v947, %v990
        %992 = vmatmul.f32.gmra.mxu0 %v408
        %v993 = vpop.f32.mrf.mxu0
        %v994 = vadd.f32 %v950, %v993
        %995 = vmatmul.f32.gmra.mxu0 %v413
        %v996 = vpop.f32.mrf.mxu0
        %v997 = vadd.f32 %v953, %v996
        %998 = vmatmul.f32.gmra.mxu0 %v418
        %v999 = vpop.f32.mrf.mxu0
        %v1000 = vadd.f32 %v956, %v999
        %1001 = vmatmul.f32.gmra.mxu0 %v423
        %v1002 = vpop.f32.mrf.mxu0
        %v1003 = vadd.f32 %v959, %v1002
        %1004 = vmatmul.f32.gmra.mxu0 %v428
        %v1005 = vpop.f32.mrf.mxu0
        %v1006 = vadd.f32 %v962, %v1005
        %1007 = vmatmul.f32.gmra.mxu0 %v433
        %v1008 = vpop.f32.mrf.mxu0
        %v1009 = vadd.f32 %v965, %v1008
        %1010 = vmatmul.f32.gmra.mxu0 %v438
        %v1011 = vpop.f32.mrf.mxu0
        %v1012 = vadd.f32 %v968, %v1011
        %1013 = vdwg.mxu0
        %1014 = vmatpush.msra.mxu0 %v617
        %1015 = vmatpush.msra.mxu0 %v615
        %1016 = vmatpush.msra.mxu0 %v613
        %1017 = vmatpush.msra.mxu0 %v611
        %1018 = vmatpush.msra.mxu0 %v609
        %1019 = vmatpush.msra.mxu0 %v607
        %1020 = vmatpush.msra.mxu0 %v605
        %1021 = vmatpush.msra.mxu0 %v603
        %1022 = vmatpush.msra.mxu0 %v601
        %1023 = vmatpush.msra.mxu0 %v599
        %1024 = vmatpush.msra.mxu0 %v597
        %1025 = vmatpush.msra.mxu0 %v595
        %1026 = vmatpush.msra.mxu0 %v593
        %1027 = vmatpush.msra.mxu0 %v591
        %1028 = vmatpush.msra.mxu0 %v589
        %1029 = vmatpush.msra.mxu0 %v587
        %1030 = vmatmul.f32.gmra.mxu0 %v399
        %v1031 = vpop.f32.mrf.mxu0
        %v1032 = vadd.f32 %v988, %v1031
        %1033 = vmatmul.f32.gmra.mxu0 %v404
        %v1034 = vpop.f32.mrf.mxu0
        %v1035 = vadd.f32 %v991, %v1034
        %1036 = vmatmul.f32.gmra.mxu0 %v409
        %v1037 = vpop.f32.mrf.mxu0
        %v1038 = vadd.f32 %v994, %v1037
        %1039 = vmatmul.f32.gmra.mxu0 %v414
        %v1040 = vpop.f32.mrf.mxu0
        %v1041 = vadd.f32 %v997, %v1040
        %1042 = vmatmul.f32.gmra.mxu0 %v419
        %v1043 = vpop.f32.mrf.mxu0
        %v1044 = vadd.f32 %v1000, %v1043
        %1045 = vmatmul.f32.gmra.mxu0 %v424
        %v1046 = vpop.f32.mrf.mxu0
        %v1047 = vadd.f32 %v1003, %v1046
        %1048 = vmatmul.f32.gmra.mxu0 %v429
        %v1049 = vpop.f32.mrf.mxu0
        %v1050 = vadd.f32 %v1006, %v1049
        %1051 = vmatmul.f32.gmra.mxu0 %v434
        %v1052 = vpop.f32.mrf.mxu0
        %v1053 = vadd.f32 %v1009, %v1052
        %1054 = vmatmul.f32.gmra.mxu0 %v439
        %v1055 = vpop.f32.mrf.mxu0
        %v1056 = vadd.f32 %v1012, %v1055
        %1057 = vdwg.mxu0
        %v1058 = vadd.f32 %v440, %v812
        %v1059 = vadd.f32 %v441, %v1032
        %v1060 = vadd.f32 %v442, %v815
        %v1061 = vadd.f32 %v443, %v1035
        %v1062 = vadd.f32 %v444, %v818
        %v1063 = vadd.f32 %v445, %v1038
        %v1064 = vadd.f32 %v446, %v821
        %v1065 = vadd.f32 %v447, %v1041
        %v1066 = vadd.f32 %v448, %v824
        %v1067 = vadd.f32 %v449, %v1044
        %v1068 = vadd.f32 %v450, %v827
        %v1069 = vadd.f32 %v451, %v1047
        %v1070 = vadd.f32 %v452, %v830
        %v1071 = vadd.f32 %v453, %v1050
        %v1072 = vadd.f32 %v454, %v833
        %v1073 = vadd.f32 %v455, %v1053
        %v1074 = vadd.f32 %v456, %v836
        %v1075 = vadd.f32 %v457, %v1056
        %1076 = vst [vmem:[#allocation2] sm:$0xff] %v1058
        %1077 = vst [vmem:[#allocation2 + $0x8] sm:$0xff] %v1059
        %1078 = vst [vmem:[#allocation2 + $0x10] sm:$0xff] %v1060
        %1079 = vst [vmem:[#allocation2 + $0x18] sm:$0xff] %v1061
        %1080 = vst [vmem:[#allocation2 + $0x20] sm:$0xff] %v1062
        %1081 = vst [vmem:[#allocation2 + $0x28] sm:$0xff] %v1063
        %1082 = vst [vmem:[#allocation2 + $0x30] sm:$0xff] %v1064
        %1083 = vst [vmem:[#allocation2 + $0x38] sm:$0xff] %v1065
        %1084 = vst [vmem:[#allocation2 + $0x40] sm:$0xff] %v1066
        %1085 = vst [vmem:[#allocation2 + $0x48] sm:$0xff] %v1067
        %1086 = vst [vmem:[#allocation2 + $0x50] sm:$0xff] %v1068
        %1087 = vst [vmem:[#allocation2 + $0x58] sm:$0xff] %v1069
        %1088 = vst [vmem:[#allocation2 + $0x60] sm:$0xff] %v1070
        %1089 = vst [vmem:[#allocation2 + $0x68] sm:$0xff] %v1071
        %1090 = vst [vmem:[#allocation2 + $0x70] sm:$0xff] %v1072
        %1091 = vst [vmem:[#allocation2 + $0x78] sm:$0xff] %v1073
        %1092 = vst [vmem:[#allocation2 + $0x80] sm:$0xff] %v1074
        %1093 = vst [vmem:[#allocation2 + $0x88] sm:$0xff] %v1075
        %p1094 = scmp.eq.s32.totalorder %s30, 1
        // Predicated region
        $region49: #{tpu_custom_call.1} parent=31 // pred_check
          %p1095 = pneg %p1094
        $region50: #{tpu_custom_call.1} parent=31 // pred_check_branch
          %1097 = sbr.rel (%p1095) target = $region52
        $region51: #{tpu_custom_call.1} parent=31 // pred_region
          %v1098 = vld [vmem:[#allocation2] sm:$0xff]
          %v1099 = vld [vmem:[#allocation2 + $0x8] sm:$0xff]
          %v1100 = vld [vmem:[#allocation2 + $0x10] sm:$0xff]
          %v1101 = vld [vmem:[#allocation2 + $0x18] sm:$0xff]
          %v1102 = vld [vmem:[#allocation2 + $0x20] sm:$0xff]
          %v1103 = vld [vmem:[#allocation2 + $0x28] sm:$0xff]
          %v1104 = vld [vmem:[#allocation2 + $0x30] sm:$0xff]
          %v1105 = vld [vmem:[#allocation2 + $0x38] sm:$0xff]
          %v1106 = vld [vmem:[#allocation2 + $0x40] sm:$0xff]
          %v1107 = vld [vmem:[#allocation2 + $0x48] sm:$0xff]
          %v1108 = vld [vmem:[#allocation2 + $0x50] sm:$0xff]
          %v1109 = vld [vmem:[#allocation2 + $0x58] sm:$0xff]
          %v1110 = vld [vmem:[#allocation2 + $0x60] sm:$0xff]
          %v1111 = vld [vmem:[#allocation2 + $0x68] sm:$0xff]
          %v1112 = vld [vmem:[#allocation2 + $0x70] sm:$0xff]
          %v1113 = vld [vmem:[#allocation2 + $0x78] sm:$0xff]
          %v1114 = vld [vmem:[#allocation2 + $0x80] sm:$0xff]
          %v1115 = vld [vmem:[#allocation2 + $0x88] sm:$0xff]
          %v1116 = vld [vmem:[#allocation8] sm:$0x3]
          %v1118 = vperm.slane %v1116, 0
          %v1119 = vperm.slane %v1116, 1
          %v1122 = vadd.f32 %v1098, %v1118
          %v1123 = vadd.f32 %v1099, %v1119
          %v1124 = vadd.f32 %v1100, %v1118
          %v1125 = vadd.f32 %v1101, %v1119
          %v1126 = vadd.f32 %v1102, %v1118
          %v1127 = vadd.f32 %v1103, %v1119
          %v1128 = vadd.f32 %v1104, %v1118
          %v1129 = vadd.f32 %v1105, %v1119
          %v1130 = vadd.f32 %v1106, %v1118
          %v1131 = vadd.f32 %v1107, %v1119
          %v1132 = vadd.f32 %v1108, %v1118
          %v1133 = vadd.f32 %v1109, %v1119
          %v1134 = vadd.f32 %v1110, %v1118
          %v1135 = vadd.f32 %v1111, %v1119
          %v1136 = vadd.f32 %v1112, %v1118
          %v1137 = vadd.f32 %v1113, %v1119
          %v1138 = vadd.f32 %v1114, %v1118
          %v1139 = vadd.f32 %v1115, %v1119
          %1140 = vst [vmem:[%s292] sm:$0xff] %v1122
          %1141 = vst [vmem:[%s292 + $0x8] sm:$0xff] %v1123
          %1142 = vst [vmem:[%s292 + $0x10] sm:$0xff] %v1124
          %1143 = vst [vmem:[%s292 + $0x18] sm:$0xff] %v1125
          %1144 = vst [vmem:[%s292 + $0x20] sm:$0xff] %v1126
          %1145 = vst [vmem:[%s292 + $0x28] sm:$0xff] %v1127
          %1146 = vst [vmem:[%s292 + $0x30] sm:$0xff] %v1128
          %1147 = vst [vmem:[%s292 + $0x38] sm:$0xff] %v1129
          %1148 = vst [vmem:[%s292 + $0x40] sm:$0xff] %v1130
          %1149 = vst [vmem:[%s292 + $0x48] sm:$0xff] %v1131
          %1150 = vst [vmem:[%s292 + $0x50] sm:$0xff] %v1132
          %1151 = vst [vmem:[%s292 + $0x58] sm:$0xff] %v1133
          %1152 = vst [vmem:[%s292 + $0x60] sm:$0xff] %v1134
          %1153 = vst [vmem:[%s292 + $0x68] sm:$0xff] %v1135
          %1154 = vst [vmem:[%s292 + $0x70] sm:$0xff] %v1136
          %1155 = vst [vmem:[%s292 + $0x78] sm:$0xff] %v1137
          %1156 = vst [vmem:[%s292 + $0x80] sm:$0xff] %v1138
          %1157 = vst [vmem:[%s292 + $0x88] sm:$0xff] %v1139
        $region52: #{tpu_custom_call.1} parent=31 // pred_fallthru
          _
        %s1158 = sand.u32 %s134, 1
        %s1159 = scalar_lea.sflag [#allocation5], %s1158
        %s1160 = sand.u32 %s134, 1
        %s1161 = smul.addr %s1160, 144
        %s1162 = scalar_lea.vmem [#allocation9], %s1161
        // Predicated region
        $region53: #{tpu_custom_call.1} parent=31 // pred_check
          %p1163 = pneg %p144
        $region54: #{tpu_custom_call.1} parent=31 // pred_check_branch
          %1165 = sbr.rel (%p1163) target = $region56
        $region55: #{tpu_custom_call.1} parent=31 // pred_region
          %s1166 = smul.u32 9, %s28
          %s1167 = smul.u32 2, %s29
          %s1168 = ssub.s32 17, %s1166
          %p1169 = scmp.lt.s32.totalorder %s1168, 9
          %s1170 = scalar_select %p1169, %s1168, 9
          %s1171 = smul.u32 8, %s1170
          %s1172 = smul.u32 %s1171, 2
          %s1173 = ssub.s32 144, %s1172
          %s1174 = sshll.u32 %s1173, 4
          %1175 = vsyncadd %s1159, %s1174
          %p1176 = scmp.ne.s32.totalorder 0, %s1172
          %s1177 = smul.addr %s1166, 2
          %s1178 = sadd.s32 %s1167, %s1177
          %s1179 = smul.addr %s1178, 8
          %s1180 = scalar_lea.hbm %s3, %s1179
          %s1181 = smul.u32 16, %s1170
          %s1182 = sshll.u32 %s1162, 4
          %s1183 = int_to_ptr.vmem [resolvable:$true] %s1182
          %s1184 = sshll.u32 %s1180, 4
          %s1185 = int_to_ptr.hbm [resolvable:$true] %s1184
          %s1186 = sshll.u32 %s1181, 4
          %1190 = dma.vmem_to_hbm [thread:$0]  (%p1176), %s1183, %s1186, %s1185, %s1159, 256, 256, 16
        $region56: #{tpu_custom_call.1} parent=31 // pred_fallthru
          _
      $region32: #{tpu_custom_call.1} parent=5 // pred_fallthru
        _
      %p1191 = scmp.le.s32.totalorder 2, %s18
      // Predicated region
      $region57: #{tpu_custom_call.1} parent=5 // pred_check
        %p1192 = pneg %p1191
      $region58: #{tpu_custom_call.1} parent=5 // pred_check_branch
        %1194 = sbr.rel (%p1192) target = $region60
      $region59: #{tpu_custom_call.1} parent=5 // pred_region
        %s1195 = ssub.s32 %s18, 2
        // Predicated region
        $region61: #{tpu_custom_call.1} parent=59 // pred_check
          %p1196 = pneg %p150
        $region62: #{tpu_custom_call.1} parent=59 // pred_check_branch
          %1198 = sbr.rel (%p1196) target = $region64
        $region63: #{tpu_custom_call.1} parent=59 // pred_region
          %s1199 = sand.u32 %s135, 1
          %s1200 = scalar_lea.sflag [#allocation5], %s1199
          %s1201 = sand.u32 %s135, 1
          %s1202 = smul.addr %s1201, 144
          %s1203 = scalar_lea.vmem [#allocation9], %s1202
          %1205 = dma.done %s1200, 2304
        $region64: #{tpu_custom_call.1} parent=59 // pred_fallthru
          _
      $region60: #{tpu_custom_call.1} parent=5 // pred_fallthru
        _
    $region6: #{tpu_custom_call.1} parent=1 // loop_footer
      %s22 = sadd.s32 1, %s18
    $region7: #{tpu_custom_call.1} parent=1 // loop_footer_branch
      %17 = sbr.rel target = $region3
    $region8: #{tpu_custom_call.1} parent=1 // loop_exit
      _
    %1206 = vsyncpa [#allocation4], 1
    %s1207 = scalar_lea.sflag [#allocation4], 1
    %1208 = vsyncpa %s1207, 1
    %1209 = vsyncpa [#allocation7], 1
    %s1210 = scalar_lea.sflag [#allocation7], 1
    %1211 = vsyncpa %s1210, 1
    %1212 = vsyncpa [#allocation5], 1
    %s1213 = scalar_lea.sflag [#allocation5], 1
    %1214 = vsyncpa %s1213, 1

</llo_original>
